<compile_context>
chip_gen: v5e
topology: v5e:2x2
jax: 0.10.0
libtpu: 0.0.40
codegen_flags: <defaults>
</compile_context>

<pallas_src>
import math

import jax
import jax.numpy as jnp
from jax.experimental import pallas as pl
from jax.experimental.pallas import tpu as pltpu


def _round_up(x, m):
    return ((x + m - 1) // m) * m


def _highway_kernel(x_ref, w_ref, b_ref, o_ref):
    # x_ref : (TM, D)    input rows (all leading dims flattened)
    # w_ref : (D, 2*D)   fused [W_H^T | W_T^T]   (resident in VMEM)
    # b_ref : (1, 2*D)   fused [b_H | b_T]
    # o_ref : (TM, D)    output rows
    D = o_ref.shape[-1]
    x = x_ref[...]
    x32 = x.astype(jnp.float32)

    # Single fused MXU pass for both linear layers (K = D, N = 2*D), f32 acc.
    y = jnp.dot(x, w_ref[...], preferred_element_type=jnp.float32)
    y = y + b_ref[...]                     # fused bias row, broadcast over TM

    h = jnp.maximum(y[:, :D], 0.0)         # relu(H(x))        (VPU)
    t = jax.nn.sigmoid(y[:, D:])           # sigmoid(T(x))     (EUP)

    # h*t + x*(1-t)  ==  x + t*(h - x)   -> one fewer VALU op per element.
    o_ref[...] = (x32 + t * (h - x32)).astype(o_ref.dtype)


def fuse_highway_params(w_h, b_h, w_t, b_t):
    """Fold the two nn.Linear layers into one MXU operand.

    Call ONCE at parameter-setup time (not per forward): w_h / w_t are
    PyTorch-layout (out_features, in_features) weights; returns
    (w_fused (D, 2D), b_fused (1, 2D)).
    """
    D = w_h.shape[1]
    w_fused = jnp.concatenate([w_h.T, w_t.T], axis=1)          # (D, 2D)
    b_fused = jnp.concatenate([b_h, b_t]).reshape(1, 2 * D)    # (1, 2D)
    return w_fused, b_fused


def highway(x, w_fused, b_fused, *, block_m=1024):
    """Highway forward.  x: (..., D); w_fused: (D, 2D); b_fused: (1, 2D).
    Returns the same shape/dtype as x."""
    orig_shape = x.shape
    D = orig_shape[-1]
    assert w_fused.shape == (D, 2 * D) and b_fused.shape == (1, 2 * D)
    M = x.size // D
    x2 = x.reshape(M, D)

    # Row-tile selection:
    #   * big tiles (block_m) for large M to hit the HBM roofline,
    #   * but always >= 2 grid steps when M > 8 so the "parallel" axis can
    #     shard across both TensorCores (v7x) and pipeline DMA with compute,
    #   * tm is a multiple of 8 (sublane) or equals the full row extent.
    if M <= block_m:
        tm = M if M <= 8 else min(M, max(8, _round_up(pl.cdiv(M, 2), 8)))
    else:
        tm = block_m
    grid_m = pl.cdiv(M, tm)   # partial last block is masked by Pallas; no pad

    out = pl.pallas_call(
        _highway_kernel,
        out_shape=jax.ShapeDtypeStruct((M, D), x.dtype),
        grid_spec=pltpu.PrefetchScalarGridSpec(
            num_scalar_prefetch=0,
            grid=(grid_m,),
            in_specs=[
                pl.BlockSpec((tm, D), lambda i: (i, 0)),        # streamed rows
                pl.BlockSpec((D, 2 * D), lambda i: (0, 0)),     # resident weight
                pl.BlockSpec((1, 2 * D), lambda i: (0, 0)),     # resident bias
            ],
            out_specs=pl.BlockSpec((tm, D), lambda i: (i, 0)),
        ),
        compiler_params=pltpu.CompilerParams(
            dimension_semantics=("parallel",)),
    )(x2, w_fused, b_fused)

    return out.reshape(orig_shape)


def _reference(x, w_h, b_h, w_t, b_t):
    # Pure-JAX reference mirroring the PyTorch forward.
    H = jax.nn.relu(x @ w_h.T + b_h)
    T = jax.nn.sigmoid(x @ w_t.T + b_t)
    return H * T + x * (1.0 - T)


if __name__ == "__main__":
    # Highway requires in_size == out_size for the residual blend; pick a
    # lane-dense feature size (multiple of 128) and enough rows for >= 2
    # parallel grid steps.
    B, T, D = 4, 128, 128

    key = jax.random.PRNGKey(0)
    k_x, k_wh, k_wt = jax.random.split(key, 3)

    x = jax.random.normal(k_x, (B, T, D), dtype=jnp.float32)

    # nn.Linear-style weight init; biases match the module's __init__:
    # H.bias zeroed, T.bias filled with -1.
    bound = 1.0 / math.sqrt(D)
    w_h = jax.random.uniform(k_wh, (D, D), minval=-bound, maxval=bound,
                             dtype=jnp.float32)
    w_t = jax.random.uniform(k_wt, (D, D), minval=-bound, maxval=bound,
                             dtype=jnp.float32)
    b_h = jnp.zeros((D,), dtype=jnp.float32)
    b_t = jnp.full((D,), -1.0, dtype=jnp.float32)

    # Parameter fusion happens once, outside the forward path.
    w_fused, b_fused = fuse_highway_params(w_h, b_h, w_t, b_t)
    w_fused, b_fused = jax.block_until_ready((w_fused, b_fused))

    out = highway(x, w_fused, b_fused)
    out = jax.block_until_ready(out)

    ref = _reference(x, w_h, b_h, w_t, b_t)
    assert out.shape == x.shape
    assert jnp.allclose(out, ref, atol=1e-5, rtol=1e-5)
    print("KERNEL_OK")
</pallas_src>

<mosaic_0001>
module attributes {stable_mosaic.version = 11 : i64} {
  func.func @_highway_kernel(%arg0: i32, %arg1: memref<256x128xf32, #tpu.memory_space<vmem>>, %arg2: memref<128x256xf32, #tpu.memory_space<vmem>>, %arg3: memref<1x256xf32, #tpu.memory_space<vmem>>, %arg4: memref<256x128xf32, #tpu.memory_space<vmem>>) attributes {dimension_semantics = [#tpu.dimension_semantics<parallel>], iteration_bounds = array<i64: 2>, scalar_prefetch = 0 : i64, scratch_operands = 0 : i64, tpu.core_type = #tpu.core_type<tc>, window_params = [{transform_indices = @transform_0, window_bounds = array<i64: 256, 128>}, {pipeline_mode = #tpu.pipeline_mode<synchronous>, transform_indices = @transform_1, window_bounds = array<i64: 128, 256>}, {pipeline_mode = #tpu.pipeline_mode<synchronous>, transform_indices = @transform_2, window_bounds = array<i64: 1, 256>}, {transform_indices = @transform_3, window_bounds = array<i64: 256, 128>}]} {
    %c0 = arith.constant 0 : index
    %c0_0 = arith.constant 0 : index
    %0 = vector.load %arg1[%c0, %c0_0] : memref<256x128xf32, #tpu.memory_space<vmem>>, vector<256x128xf32>
    %c0_1 = arith.constant 0 : index
    %c0_2 = arith.constant 0 : index
    %1 = vector.load %arg2[%c0_1, %c0_2] : memref<128x256xf32, #tpu.memory_space<vmem>>, vector<128x256xf32>
    %cst = arith.constant dense<0.000000e+00> : vector<256x256xf32>
    %2 = tpu.matmul %0, %1, %cst {dimension_numbers = #tpu.dot_dimension_numbers<[1], [0], [0], [1], [0, 0, 1, 1], [], []>} : vector<256x128xf32>, vector<128x256xf32>, vector<256x256xf32> -> vector<256x256xf32>
    %c0_3 = arith.constant 0 : index
    %c0_4 = arith.constant 0 : index
    %3 = vector.load %arg3[%c0_3, %c0_4] : memref<1x256xf32, #tpu.memory_space<vmem>>, vector<1x256xf32>
    %4 = vector.broadcast %3 : vector<1x256xf32> to vector<256x256xf32>
    %5 = arith.addf %2, %4 : vector<256x256xf32>
    %6 = vector.extract_strided_slice %5 {offsets = [0, 0], sizes = [256, 128], strides = [1, 1]} : vector<256x256xf32> to vector<256x128xf32>
    %cst_5 = arith.constant 0.000000e+00 : f32
    %7 = vector.broadcast %cst_5 : f32 to vector<256x128xf32>
    %8 = arith.maximumf %6, %7 : vector<256x128xf32>
    %9 = vector.extract_strided_slice %5 {offsets = [0, 128], sizes = [256, 128], strides = [1, 1]} : vector<256x256xf32> to vector<256x128xf32>
    %10 = arith.negf %9 : vector<256x128xf32>
    %11 = math.exp %10 : vector<256x128xf32>
    %cst_6 = arith.constant 1.000000e+00 : f32
    %12 = vector.broadcast %cst_6 : f32 to vector<256x128xf32>
    %13 = arith.addf %12, %11 : vector<256x128xf32>
    %14 = arith.divf %12, %13 : vector<256x128xf32>
    %15 = arith.subf %8, %0 : vector<256x128xf32>
    %16 = arith.mulf %14, %15 : vector<256x128xf32>
    %17 = arith.addf %0, %16 : vector<256x128xf32>
    %c0_7 = arith.constant 0 : index
    %c0_8 = arith.constant 0 : index
    %18 = vector.load %arg4[%c0_7, %c0_8] : memref<256x128xf32, #tpu.memory_space<vmem>>, vector<256x128xf32>
    tpu.vector_store %arg4[%c0_7, %c0_8], %17 {strides = array<i32>} : memref<256x128xf32, #tpu.memory_space<vmem>>, vector<256x128xf32>,
    return
  }
  func.func @transform_0(%arg0: i32) -> (i32, i32) {
    %c0_i32 = arith.constant 0 : i32
    %c0_i32_0 = arith.constant 0 : i32
    return %arg0, %c0_i32 : i32, i32
  }
  func.func @transform_1(%arg0: i32) -> (i32, i32) {
    %c0_i32 = arith.constant 0 : i32
    %c0_i32_0 = arith.constant 0 : i32
    %c0_i32_1 = arith.constant 0 : i32
    return %c0_i32, %c0_i32_0 : i32, i32
  }
  func.func @transform_2(%arg0: i32) -> (i32, i32) {
    %c0_i32 = arith.constant 0 : i32
    %c0_i32_0 = arith.constant 0 : i32
    %c0_i32_1 = arith.constant 0 : i32
    return %c0_i32, %c0_i32_0 : i32, i32
  }
  func.func @transform_3(%arg0: i32) -> (i32, i32) {
    %c0_i32 = arith.constant 0 : i32
    %c0_i32_0 = arith.constant 0 : i32
    return %arg0, %c0_i32 : i32, i32
  }
}

</mosaic_0001>

<llo_original>
// kernel: tpu_custom_call.1
$region0: #{tpu_custom_call.1}
  #allocation0 [shape = 'u32[]', space=smem, size = 0x4, offset = 0x4, fixed_abs, tag = 'smem constant byte address 0x4 - core index']
  #allocation1 [shape = 'u32[72,128]{1,0:T(1,128)}', space=vmem, size = 0x9000, scoped, tag = 'internal scratch']
  %s0 = inlined_call_operand.hbm [shape: f32[512,128], index: 0, kind: input, shape index: {}]
  %s1 = inlined_call_operand.hbm [shape: f32[128,256], index: 1, kind: input, shape index: {}]
  %s2 = inlined_call_operand.hbm [shape: f32[1,256], index: 2, kind: input, shape index: {}]
  %s3 = inlined_call_operand.hbm [shape: f32[512,128], index: 3, kind: output, shape index: {}]
  %s4 = sld [smem:[#allocation0]]
  $region57: #{tpu_custom_call.1} parent=0
    _
  %s6 = ssub.s32 1, %s4
  %s7 = scalar_select 0, %s6, %s4
  $region1: #{tpu_custom_call.1} parent=0
    #allocation2 [shape = 'u8[262144]{0}', space=vmem, size = 0x40000, scoped, tag = 'input window, operand 0']
    #allocation3 [shape = 's32[2]{0}', space=sflag, size = 0x8, scoped, tag = 'scoped memory for tpu_custom_call.1']
    #allocation4 [shape = 's32[2]{0}', space=sflag, size = 0x8, scoped, tag = 'scoped memory for tpu_custom_call.1']
    #allocation5 [shape = 'u8[131072]{0}', space=vmem, size = 0x20000, scoped, tag = 'input window, operand 1, single buffered']
    #allocation6 [shape = 's32[1]{0}', space=sflag, size = 0x4, scoped, tag = 'scoped memory for tpu_custom_call.1']
    #allocation7 [shape = 'u8[1024]{0}', space=vmem, size = 0x400, scoped, tag = 'input window, operand 2, single buffered']
    #allocation8 [shape = 'u8[262144]{0}', space=vmem, size = 0x40000, scoped, tag = 'output window, operand 0']
    %8 = vsyncpa [#allocation3], 0
    %s9 = scalar_lea.sflag [#allocation3], 1
    %10 = vsyncpa %s9, 0
    %11 = vsyncpa [#allocation6], 0
    %12 = vsyncpa [#allocation4], 0
    %s13 = scalar_lea.sflag [#allocation4], 1
    %14 = vsyncpa %s13, 0
    loop: start=0, step=1, limit=4
    $region2: #{tpu_custom_call.1} parent=1 // loop_pre_header
      _
    $region3: #{tpu_custom_call.1} parent=1 // loop_header
      %s16 = sphi 0, %s20
      %p17 = scmp.ge.s32.totalorder %s16, 4
      %s26 = sphi 0, %s28
      %s29 = sphi 0, %s26
      %s30 = sphi 0, %s29
      %s46 = sphi 0, %s30
      %s50 = sphi 0, %s50
      %s52 = sphi 0, %s50
      %s53 = sphi 0, %s52
      %s67 = sphi 0, %s53
      %s71 = sphi 0, %s71
      %s73 = sphi 0, %s71
      %s74 = sphi 0, %s73
      %s88 = sphi 0, %s74
      %s94 = sphi 0, %s96
      %s97 = sphi 0, %s94
      %s98 = sphi 0, %s97
      %s114 = sphi 0, %s98
    $region4: #{tpu_custom_call.1} parent=1 // loop_header_branch
      %19 = sbr.rel (%p17) target = $region8
    $region5: #{tpu_custom_call.1} parent=1 // loop_body
      %s21 = ssub.s32 %s16, 1
      %s22 = ssub.s32 %s16, 2
      %s23 = sadd.s32 %s16, 1
      %s24 = ssub.s32 %s16, %s23
      %p25 = scmp.eq.s32.totalorder %s24, 0
      %s27 = sadd.s32 %s26, 1
      %s28 = scalar_select %p25, %s26, %s27
      %p31 = pneg %p25
      %p32 = scmp.eq.s32.totalorder %s16, 1
      %p33 = por %p31, %p32
      %p34 = scmp.ne.s32.totalorder %s26, %s29
      %p35 = scmp.eq.s32.totalorder %s16, 0
      %p36 = por %p34, %p35
      %p37 = scmp.ne.s32.totalorder %s26, %s29
      %p38 = scmp.eq.s32.totalorder %s21, 1
      %p39 = por %p37, %p38
      %p40 = scmp.ne.s32.totalorder %s29, %s30
      %p41 = scmp.eq.s32.totalorder %s21, 0
      %p42 = por %p40, %p41
      %p43 = scmp.ne.s32.totalorder %s29, %s30
      %p44 = scmp.eq.s32.totalorder %s22, 1
      %p45 = por %p43, %p44
      %p47 = scmp.ne.s32.totalorder %s30, %s46
      %p48 = scmp.eq.s32.totalorder %s22, 0
      %p49 = por %p47, %p48
      %s51 = sadd.s32 %s50, 1
      %p54 = scmp.eq.s32.totalorder %s16, 1
      %p55 = scmp.ne.s32.totalorder %s50, %s52
      %p56 = scmp.eq.s32.totalorder %s16, 0
      %p57 = por %p55, %p56
      %p58 = scmp.ne.s32.totalorder %s50, %s52
      %p59 = scmp.eq.s32.totalorder %s21, 1
      %p60 = por %p58, %p59
      %p61 = scmp.ne.s32.totalorder %s52, %s53
      %p62 = scmp.eq.s32.totalorder %s21, 0
      %p63 = por %p61, %p62
      %p64 = scmp.ne.s32.totalorder %s52, %s53
      %p65 = scmp.eq.s32.totalorder %s22, 1
      %p66 = por %p64, %p65
      %p68 = scmp.ne.s32.totalorder %s53, %s67
      %p69 = scmp.eq.s32.totalorder %s22, 0
      %p70 = por %p68, %p69
      %s72 = sadd.s32 %s71, 1
      %p75 = scmp.eq.s32.totalorder %s16, 1
      %p76 = scmp.ne.s32.totalorder %s71, %s73
      %p77 = scmp.eq.s32.totalorder %s16, 0
      %p78 = por %p76, %p77
      %p79 = scmp.ne.s32.totalorder %s71, %s73
      %p80 = scmp.eq.s32.totalorder %s21, 1
      %p81 = por %p79, %p80
      %p82 = scmp.ne.s32.totalorder %s73, %s74
      %p83 = scmp.eq.s32.totalorder %s21, 0
      %p84 = por %p82, %p83
      %p85 = scmp.ne.s32.totalorder %s73, %s74
      %p86 = scmp.eq.s32.totalorder %s22, 1
      %p87 = por %p85, %p86
      %p89 = scmp.ne.s32.totalorder %s74, %s88
      %p90 = scmp.eq.s32.totalorder %s22, 0
      %p91 = por %p89, %p90
      %s92 = ssub.s32 %s16, %s23
      %p93 = scmp.eq.s32.totalorder %s92, 0
      %s95 = sadd.s32 %s94, 1
      %s96 = scalar_select %p93, %s94, %s95
      %p99 = pneg %p93
      %p100 = scmp.eq.s32.totalorder %s16, 1
      %p101 = por %p99, %p100
      %p102 = scmp.ne.s32.totalorder %s94, %s97
      %p103 = scmp.eq.s32.totalorder %s16, 0
      %p104 = por %p102, %p103
      %p105 = scmp.ne.s32.totalorder %s94, %s97
      %p106 = scmp.eq.s32.totalorder %s21, 1
      %p107 = por %p105, %p106
      %p108 = scmp.ne.s32.totalorder %s97, %s98
      %p109 = scmp.eq.s32.totalorder %s21, 0
      %p110 = por %p108, %p109
      %p111 = scmp.ne.s32.totalorder %s97, %s98
      %p112 = scmp.eq.s32.totalorder %s22, 1
      %p113 = por %p111, %p112
      %p115 = scmp.ne.s32.totalorder %s98, %s114
      %p116 = scmp.eq.s32.totalorder %s22, 0
      %p117 = por %p115, %p116
      %p118 = scmp.le.s32.totalorder 1, %s16
      %p119 = scmp.lt.s32.totalorder %s16, 3
      %p120 = pnand %p118, %p119
      %p121 = pneg %p120
      // Predicated region
      $region9: #{tpu_custom_call.1} parent=5 // pred_check
        _
      $region10: #{tpu_custom_call.1} parent=5 // pred_check_branch
        %123 = sbr.rel (%p120) target = $region12
      $region11: #{tpu_custom_call.1} parent=5 // pred_region
        %s124 = ssub.s32 %s16, 1
        // Predicated region
        $region13: #{tpu_custom_call.1} parent=11 // pred_check
          %p125 = pneg %p63
        $region14: #{tpu_custom_call.1} parent=11 // pred_check_branch
          %127 = sbr.rel (%p125) target = $region16
        $region15: #{tpu_custom_call.1} parent=11 // pred_region
          %129 = vsyncadd [#allocation6], 0
          %s130 = sshll.u32 %s1, 4
          %s131 = int_to_ptr.hbm [resolvable:$true] %s130
          %s132 = sshll.u32 [#allocation5], 4
          %s133 = int_to_ptr.vmem [resolvable:$true] %s132
          %138 = dma.hbm_to_vmem [thread:$0]  %s131, 4096, %s133, [#allocation6], 256, 256, 16
        $region16: #{tpu_custom_call.1} parent=11 // pred_fallthru
          _
        // Predicated region
        $region17: #{tpu_custom_call.1} parent=11 // pred_check
          %p139 = pneg %p84
        $region18: #{tpu_custom_call.1} parent=11 // pred_check_branch
          %141 = sbr.rel (%p139) target = $region20
        $region19: #{tpu_custom_call.1} parent=11 // pred_region
          %143 = vsyncadd [#allocation6], 0
          %s145 = sshll.u32 %s2, 4
          %s146 = int_to_ptr.hbm [resolvable:$true] %s145
          %s147 = sshll.u32 [#allocation7], 4
          %s148 = int_to_ptr.vmem [resolvable:$true] %s147
          %150 = dma.hbm_to_vmem [thread:$0]  %s146, 32, %s148, [#allocation6]
        $region20: #{tpu_custom_call.1} parent=11 // pred_fallthru
          _
      $region12: #{tpu_custom_call.1} parent=5 // pred_fallthru
        _
      %p151 = scmp.lt.s32.totalorder %s16, 2
      // Predicated region
      $region21: #{tpu_custom_call.1} parent=5 // pred_check
        %p152 = pneg %p151
      $region22: #{tpu_custom_call.1} parent=5 // pred_check_branch
        %154 = sbr.rel (%p152) target = $region24
      $region23: #{tpu_custom_call.1} parent=5 // pred_region
        // Predicated region
        $region25: #{tpu_custom_call.1} parent=23 // pred_check
          %p155 = pneg %p36
        $region26: #{tpu_custom_call.1} parent=23 // pred_check_branch
          %157 = sbr.rel (%p155) target = $region28
        $region27: #{tpu_custom_call.1} parent=23 // pred_region
          %s158 = sand.u32 %s26, 1
          %s159 = scalar_lea.sflag [#allocation3], %s158
          %s160 = sand.u32 %s26, 1
          %s161 = smul.addr %s160, 256
          %s162 = scalar_lea.vmem [#allocation2], %s161
          %s163 = smul.u32 32, %s16
          %165 = vsyncadd %s159, 0
          %s166 = smul.addr %s163, 8
          %s167 = scalar_lea.hbm %s0, %s166
          %s168 = sshll.u32 %s167, 4
          %s169 = int_to_ptr.hbm [resolvable:$true] %s168
          %s170 = sshll.u32 %s162, 4
          %s171 = int_to_ptr.vmem [resolvable:$true] %s170
          %176 = dma.hbm_to_vmem [thread:$0]  %s169, 4096, %s171, %s159, 128, 128, 8
        $region28: #{tpu_custom_call.1} parent=23 // pred_fallthru
          _
      $region24: #{tpu_custom_call.1} parent=5 // pred_fallthru
        _
      %p177 = scmp.le.s32.totalorder 1, %s16
      %p178 = scmp.lt.s32.totalorder %s16, 3
      %p179 = pnand %p177, %p178
      %p180 = pneg %p179
      // Predicated region
      $region29: #{tpu_custom_call.1} parent=5 // pred_check
        _
      $region30: #{tpu_custom_call.1} parent=5 // pred_check_branch
        %182 = sbr.rel (%p179) target = $region32
      $region31: #{tpu_custom_call.1} parent=5 // pred_region
        %s183 = ssub.s32 %s16, 1
        %s184 = sand.u32 %s29, 1
        %s185 = scalar_lea.sflag [#allocation3], %s184
        %s186 = sand.u32 %s29, 1
        %s187 = smul.addr %s186, 256
        %s188 = scalar_lea.vmem [#allocation2], %s187
        // Predicated region
        $region33: #{tpu_custom_call.1} parent=31 // pred_check
          %p189 = pneg %p42
        $region34: #{tpu_custom_call.1} parent=31 // pred_check_branch
          %191 = sbr.rel (%p189) target = $region36
        $region35: #{tpu_custom_call.1} parent=31 // pred_region
          %193 = dma.done %s185, 4096
        $region36: #{tpu_custom_call.1} parent=31 // pred_fallthru
          _
        // Predicated region
        $region37: #{tpu_custom_call.1} parent=31 // pred_check
          %p194 = pneg %p63
        $region38: #{tpu_custom_call.1} parent=31 // pred_check_branch
          %196 = sbr.rel (%p194) target = $region40
        $region39: #{tpu_custom_call.1} parent=31 // pred_region
          %198 = dma.done [#allocation6], 4096
        $region40: #{tpu_custom_call.1} parent=31 // pred_fallthru
          _
        // Predicated region
        $region41: #{tpu_custom_call.1} parent=31 // pred_check
          %p199 = pneg %p84
        $region42: #{tpu_custom_call.1} parent=31 // pred_check_branch
          %201 = sbr.rel (%p199) target = $region44
        $region43: #{tpu_custom_call.1} parent=31 // pred_region
          %203 = dma.done [#allocation6], 32
        $region44: #{tpu_custom_call.1} parent=31 // pred_fallthru
          _
        %s204 = sand.u32 %s29, 1
        %s205 = scalar_lea.sflag [#allocation3], %s204
        %s206 = sand.u32 %s29, 1
        %s207 = smul.addr %s206, 256
        %s208 = scalar_lea.vmem [#allocation2], %s207
        %p209 = pneg %p42
        %p210 = pneg %p39
        %p211 = pneg %p63
        %p212 = pneg %p60
        %p213 = pneg %p84
        %p214 = pneg %p81
        %p215 = pneg %p110
        %p216 = pneg %p107
        %s217 = sand.u32 %s97, 1
        %s218 = scalar_lea.sflag [#allocation4], %s217
        %s219 = sand.u32 %s97, 1
        %s220 = smul.addr %s219, 256
        %s221 = scalar_lea.vmem [#allocation8], %s220
        %s222 = smul.u32 32, %s21
        %s223 = smul.u32 32, %s21
        %v224 = vld [vmem:[%s188] sm:$0xff]
        %v225 = vld [vmem:[%s188 + $0x8] sm:$0xff]
        %v226 = vld [vmem:[%s188 + $0x10] sm:$0xff]
        %v227 = vld [vmem:[%s188 + $0x18] sm:$0xff]
        %v228 = vld [vmem:[%s188 + $0x20] sm:$0xff]
        %v229 = vld [vmem:[%s188 + $0x28] sm:$0xff]
        %v230 = vld [vmem:[%s188 + $0x30] sm:$0xff]
        %v231 = vld [vmem:[%s188 + $0x38] sm:$0xff]
        %v232 = vld [vmem:[%s188 + $0x40] sm:$0xff]
        %v233 = vld [vmem:[%s188 + $0x48] sm:$0xff]
        %v234 = vld [vmem:[%s188 + $0x50] sm:$0xff]
        %v235 = vld [vmem:[%s188 + $0x58] sm:$0xff]
        %v236 = vld [vmem:[%s188 + $0x60] sm:$0xff]
        %v237 = vld [vmem:[%s188 + $0x68] sm:$0xff]
        %v238 = vld [vmem:[%s188 + $0x70] sm:$0xff]
        %v239 = vld [vmem:[%s188 + $0x78] sm:$0xff]
        %v240 = vld [vmem:[%s188 + $0x80] sm:$0xff]
        %v241 = vld [vmem:[%s188 + $0x88] sm:$0xff]
        %v242 = vld [vmem:[%s188 + $0x90] sm:$0xff]
        %v243 = vld [vmem:[%s188 + $0x98] sm:$0xff]
        %v244 = vld [vmem:[%s188 + $0xa0] sm:$0xff]
        %v245 = vld [vmem:[%s188 + $0xa8] sm:$0xff]
        %v246 = vld [vmem:[%s188 + $0xb0] sm:$0xff]
        %v247 = vld [vmem:[%s188 + $0xb8] sm:$0xff]
        %v248 = vld [vmem:[%s188 + $0xc0] sm:$0xff]
        %v249 = vld [vmem:[%s188 + $0xc8] sm:$0xff]
        %v250 = vld [vmem:[%s188 + $0xd0] sm:$0xff]
        %v251 = vld [vmem:[%s188 + $0xd8] sm:$0xff]
        %v252 = vld [vmem:[%s188 + $0xe0] sm:$0xff]
        %v253 = vld [vmem:[%s188 + $0xe8] sm:$0xff]
        %v254 = vld [vmem:[%s188 + $0xf0] sm:$0xff]
        %v255 = vld [vmem:[%s188 + $0xf8] sm:$0xff]
        %v256 = vld [vmem:[#allocation5] sm:$0xff]
        %v257 = vld [vmem:[#allocation5 + $0x8] sm:$0xff]
        %v258 = vld [vmem:[#allocation5 + $0x10] sm:$0xff]
        %v259 = vld [vmem:[#allocation5 + $0x18] sm:$0xff]
        %v260 = vld [vmem:[#allocation5 + $0x20] sm:$0xff]
        %v261 = vld [vmem:[#allocation5 + $0x28] sm:$0xff]
        %v262 = vld [vmem:[#allocation5 + $0x30] sm:$0xff]
        %v263 = vld [vmem:[#allocation5 + $0x38] sm:$0xff]
        %v264 = vld [vmem:[#allocation5 + $0x40] sm:$0xff]
        %v265 = vld [vmem:[#allocation5 + $0x48] sm:$0xff]
        %v266 = vld [vmem:[#allocation5 + $0x50] sm:$0xff]
        %v267 = vld [vmem:[#allocation5 + $0x58] sm:$0xff]
        %v268 = vld [vmem:[#allocation5 + $0x60] sm:$0xff]
        %v269 = vld [vmem:[#allocation5 + $0x68] sm:$0xff]
        %v270 = vld [vmem:[#allocation5 + $0x70] sm:$0xff]
        %v271 = vld [vmem:[#allocation5 + $0x78] sm:$0xff]
        %v272 = vld [vmem:[#allocation5 + $0x80] sm:$0xff]
        %v273 = vld [vmem:[#allocation5 + $0x88] sm:$0xff]
        %v274 = vld [vmem:[#allocation5 + $0x90] sm:$0xff]
        %v275 = vld [vmem:[#allocation5 + $0x98] sm:$0xff]
        %v276 = vld [vmem:[#allocation5 + $0xa0] sm:$0xff]
        %v277 = vld [vmem:[#allocation5 + $0xa8] sm:$0xff]
        %v278 = vld [vmem:[#allocation5 + $0xb0] sm:$0xff]
        %v279 = vld [vmem:[#allocation5 + $0xb8] sm:$0xff]
        %v280 = vld [vmem:[#allocation5 + $0xc0] sm:$0xff]
        %v281 = vld [vmem:[#allocation5 + $0xc8] sm:$0xff]
        %v282 = vld [vmem:[#allocation5 + $0xd0] sm:$0xff]
        %v283 = vld [vmem:[#allocation5 + $0xd8] sm:$0xff]
        %v284 = vld [vmem:[#allocation5 + $0xe0] sm:$0xff]
        %v285 = vld [vmem:[#allocation5 + $0xe8] sm:$0xff]
        %v286 = vld [vmem:[#allocation5 + $0xf0] sm:$0xff]
        %v287 = vld [vmem:[#allocation5 + $0xf8] sm:$0xff]
        %v288 = vld [vmem:[#allocation7] sm:$0x3]
        %v290 = vperm.slane %v288, 0
        %v291 = vperm.slane %v288, 1
        %294 = vmatpush.msra.mxu0 %v286
        %295 = vmatpush.msra.mxu0 %v284
        %296 = vmatpush.msra.mxu0 %v282
        %297 = vmatpush.msra.mxu0 %v280
        %298 = vmatpush.msra.mxu0 %v278
        %299 = vmatpush.msra.mxu0 %v276
        %300 = vmatpush.msra.mxu0 %v274
        %301 = vmatpush.msra.mxu0 %v272
        %302 = vmatpush.msra.mxu0 %v270
        %303 = vmatpush.msra.mxu0 %v268
        %304 = vmatpush.msra.mxu0 %v266
        %305 = vmatpush.msra.mxu0 %v264
        %306 = vmatpush.msra.mxu0 %v262
        %307 = vmatpush.msra.mxu0 %v260
        %308 = vmatpush.msra.mxu0 %v258
        %309 = vmatpush.msra.mxu0 %v256
        %310 = vmatmul.f32.gmra.mxu0 %v224
        %v311 = vpop.f32.mrf.mxu0
        %v312 = vadd.f32 %v290, %v311
        %313 = vmatmul.f32.gmra.mxu0 %v225
        %v314 = vpop.f32.mrf.mxu0
        %v315 = vadd.f32 %v290, %v314
        %316 = vmatmul.f32.gmra.mxu0 %v226
        %v317 = vpop.f32.mrf.mxu0
        %v318 = vadd.f32 %v290, %v317
        %319 = vmatmul.f32.gmra.mxu0 %v227
        %v320 = vpop.f32.mrf.mxu0
        %v321 = vadd.f32 %v290, %v320
        %322 = vmatmul.f32.gmra.mxu0 %v228
        %v323 = vpop.f32.mrf.mxu0
        %v324 = vadd.f32 %v290, %v323
        %325 = vmatmul.f32.gmra.mxu0 %v229
        %v326 = vpop.f32.mrf.mxu0
        %v327 = vadd.f32 %v290, %v326
        %328 = vmatmul.f32.gmra.mxu0 %v230
        %v329 = vpop.f32.mrf.mxu0
        %v330 = vadd.f32 %v290, %v329
        %331 = vmatmul.f32.gmra.mxu0 %v231
        %v332 = vpop.f32.mrf.mxu0
        %v333 = vadd.f32 %v290, %v332
        %334 = vmatmul.f32.gmra.mxu0 %v232
        %v335 = vpop.f32.mrf.mxu0
        %v336 = vadd.f32 %v290, %v335
        %337 = vmatmul.f32.gmra.mxu0 %v233
        %v338 = vpop.f32.mrf.mxu0
        %v339 = vadd.f32 %v290, %v338
        %340 = vmatmul.f32.gmra.mxu0 %v234
        %v341 = vpop.f32.mrf.mxu0
        %v342 = vadd.f32 %v290, %v341
        %343 = vmatmul.f32.gmra.mxu0 %v235
        %v344 = vpop.f32.mrf.mxu0
        %v345 = vadd.f32 %v290, %v344
        %346 = vmatmul.f32.gmra.mxu0 %v236
        %v347 = vpop.f32.mrf.mxu0
        %v348 = vadd.f32 %v290, %v347
        %349 = vmatmul.f32.gmra.mxu0 %v237
        %v350 = vpop.f32.mrf.mxu0
        %v351 = vadd.f32 %v290, %v350
        %352 = vmatmul.f32.gmra.mxu0 %v238
        %v353 = vpop.f32.mrf.mxu0
        %v354 = vadd.f32 %v290, %v353
        %355 = vmatmul.f32.gmra.mxu0 %v239
        %v356 = vpop.f32.mrf.mxu0
        %v357 = vadd.f32 %v290, %v356
        %358 = vmatmul.f32.gmra.mxu0 %v240
        %v359 = vpop.f32.mrf.mxu0
        %v360 = vadd.f32 %v290, %v359
        %361 = vmatmul.f32.gmra.mxu0 %v241
        %v362 = vpop.f32.mrf.mxu0
        %v363 = vadd.f32 %v290, %v362
        %364 = vmatmul.f32.gmra.mxu0 %v242
        %v365 = vpop.f32.mrf.mxu0
        %v366 = vadd.f32 %v290, %v365
        %367 = vmatmul.f32.gmra.mxu0 %v243
        %v368 = vpop.f32.mrf.mxu0
        %v369 = vadd.f32 %v290, %v368
        %370 = vmatmul.f32.gmra.mxu0 %v244
        %v371 = vpop.f32.mrf.mxu0
        %v372 = vadd.f32 %v290, %v371
        %373 = vmatmul.f32.gmra.mxu0 %v245
        %v374 = vpop.f32.mrf.mxu0
        %v375 = vadd.f32 %v290, %v374
        %376 = vmatmul.f32.gmra.mxu0 %v246
        %v377 = vpop.f32.mrf.mxu0
        %v378 = vadd.f32 %v290, %v377
        %379 = vmatmul.f32.gmra.mxu0 %v247
        %v380 = vpop.f32.mrf.mxu0
        %v381 = vadd.f32 %v290, %v380
        %382 = vmatmul.f32.gmra.mxu0 %v248
        %v383 = vpop.f32.mrf.mxu0
        %v384 = vadd.f32 %v290, %v383
        %385 = vmatmul.f32.gmra.mxu0 %v249
        %v386 = vpop.f32.mrf.mxu0
        %v387 = vadd.f32 %v290, %v386
        %388 = vmatmul.f32.gmra.mxu0 %v250
        %v389 = vpop.f32.mrf.mxu0
        %v390 = vadd.f32 %v290, %v389
        %391 = vmatmul.f32.gmra.mxu0 %v251
        %v392 = vpop.f32.mrf.mxu0
        %v393 = vadd.f32 %v290, %v392
        %394 = vmatmul.f32.gmra.mxu0 %v252
        %v395 = vpop.f32.mrf.mxu0
        %v396 = vadd.f32 %v290, %v395
        %397 = vmatmul.f32.gmra.mxu0 %v253
        %v398 = vpop.f32.mrf.mxu0
        %v399 = vadd.f32 %v290, %v398
        %400 = vmatmul.f32.gmra.mxu0 %v254
        %v401 = vpop.f32.mrf.mxu0
        %v402 = vadd.f32 %v290, %v401
        %403 = vmatmul.f32.gmra.mxu0 %v255
        %v404 = vpop.f32.mrf.mxu0
        %v405 = vadd.f32 %v290, %v404
        %406 = vdwg.mxu0
        %407 = vmatpush.msra.mxu0 %v287
        %408 = vmatpush.msra.mxu0 %v285
        %409 = vmatpush.msra.mxu0 %v283
        %410 = vmatpush.msra.mxu0 %v281
        %411 = vmatpush.msra.mxu0 %v279
        %412 = vmatpush.msra.mxu0 %v277
        %413 = vmatpush.msra.mxu0 %v275
        %414 = vmatpush.msra.mxu0 %v273
        %415 = vmatpush.msra.mxu0 %v271
        %416 = vmatpush.msra.mxu0 %v269
        %417 = vmatpush.msra.mxu0 %v267
        %418 = vmatpush.msra.mxu0 %v265
        %419 = vmatpush.msra.mxu0 %v263
        %420 = vmatpush.msra.mxu0 %v261
        %421 = vmatpush.msra.mxu0 %v259
        %422 = vmatpush.msra.mxu0 %v257
        %423 = vmatmul.f32.gmra.mxu0 %v224
        %v424 = vpop.f32.mrf.mxu0
        %v425 = vadd.f32 %v291, %v424
        %426 = vmatmul.f32.gmra.mxu0 %v225
        %v427 = vpop.f32.mrf.mxu0
        %v428 = vadd.f32 %v291, %v427
        %429 = vmatmul.f32.gmra.mxu0 %v226
        %v430 = vpop.f32.mrf.mxu0
        %v431 = vadd.f32 %v291, %v430
        %432 = vmatmul.f32.gmra.mxu0 %v227
        %v433 = vpop.f32.mrf.mxu0
        %v434 = vadd.f32 %v291, %v433
        %435 = vmatmul.f32.gmra.mxu0 %v228
        %v436 = vpop.f32.mrf.mxu0
        %v437 = vadd.f32 %v291, %v436
        %438 = vmatmul.f32.gmra.mxu0 %v229
        %v439 = vpop.f32.mrf.mxu0
        %v440 = vadd.f32 %v291, %v439
        %441 = vmatmul.f32.gmra.mxu0 %v230
        %v442 = vpop.f32.mrf.mxu0
        %v443 = vadd.f32 %v291, %v442
        %444 = vmatmul.f32.gmra.mxu0 %v231
        %v445 = vpop.f32.mrf.mxu0
        %v446 = vadd.f32 %v291, %v445
        %447 = vmatmul.f32.gmra.mxu0 %v232
        %v448 = vpop.f32.mrf.mxu0
        %v449 = vadd.f32 %v291, %v448
        %450 = vmatmul.f32.gmra.mxu0 %v233
        %v451 = vpop.f32.mrf.mxu0
        %v452 = vadd.f32 %v291, %v451
        %453 = vmatmul.f32.gmra.mxu0 %v234
        %v454 = vpop.f32.mrf.mxu0
        %v455 = vadd.f32 %v291, %v454
        %456 = vmatmul.f32.gmra.mxu0 %v235
        %v457 = vpop.f32.mrf.mxu0
        %v458 = vadd.f32 %v291, %v457
        %459 = vmatmul.f32.gmra.mxu0 %v236
        %v460 = vpop.f32.mrf.mxu0
        %v461 = vadd.f32 %v291, %v460
        %462 = vmatmul.f32.gmra.mxu0 %v237
        %v463 = vpop.f32.mrf.mxu0
        %v464 = vadd.f32 %v291, %v463
        %465 = vmatmul.f32.gmra.mxu0 %v238
        %v466 = vpop.f32.mrf.mxu0
        %v467 = vadd.f32 %v291, %v466
        %468 = vmatmul.f32.gmra.mxu0 %v239
        %v469 = vpop.f32.mrf.mxu0
        %v470 = vadd.f32 %v291, %v469
        %471 = vmatmul.f32.gmra.mxu0 %v240
        %v472 = vpop.f32.mrf.mxu0
        %v473 = vadd.f32 %v291, %v472
        %474 = vmatmul.f32.gmra.mxu0 %v241
        %v475 = vpop.f32.mrf.mxu0
        %v476 = vadd.f32 %v291, %v475
        %477 = vmatmul.f32.gmra.mxu0 %v242
        %v478 = vpop.f32.mrf.mxu0
        %v479 = vadd.f32 %v291, %v478
        %480 = vmatmul.f32.gmra.mxu0 %v243
        %v481 = vpop.f32.mrf.mxu0
        %v482 = vadd.f32 %v291, %v481
        %483 = vmatmul.f32.gmra.mxu0 %v244
        %v484 = vpop.f32.mrf.mxu0
        %v485 = vadd.f32 %v291, %v484
        %486 = vmatmul.f32.gmra.mxu0 %v245
        %v487 = vpop.f32.mrf.mxu0
        %v488 = vadd.f32 %v291, %v487
        %489 = vmatmul.f32.gmra.mxu0 %v246
        %v490 = vpop.f32.mrf.mxu0
        %v491 = vadd.f32 %v291, %v490
        %492 = vmatmul.f32.gmra.mxu0 %v247
        %v493 = vpop.f32.mrf.mxu0
        %v494 = vadd.f32 %v291, %v493
        %495 = vmatmul.f32.gmra.mxu0 %v248
        %v496 = vpop.f32.mrf.mxu0
        %v497 = vadd.f32 %v291, %v496
        %498 = vmatmul.f32.gmra.mxu0 %v249
        %v499 = vpop.f32.mrf.mxu0
        %v500 = vadd.f32 %v291, %v499
        %501 = vmatmul.f32.gmra.mxu0 %v250
        %v502 = vpop.f32.mrf.mxu0
        %v503 = vadd.f32 %v291, %v502
        %504 = vmatmul.f32.gmra.mxu0 %v251
        %v505 = vpop.f32.mrf.mxu0
        %v506 = vadd.f32 %v291, %v505
        %507 = vmatmul.f32.gmra.mxu0 %v252
        %v508 = vpop.f32.mrf.mxu0
        %v509 = vadd.f32 %v291, %v508
        %510 = vmatmul.f32.gmra.mxu0 %v253
        %v511 = vpop.f32.mrf.mxu0
        %v512 = vadd.f32 %v291, %v511
        %513 = vmatmul.f32.gmra.mxu0 %v254
        %v514 = vpop.f32.mrf.mxu0
        %v515 = vadd.f32 %v291, %v514
        %516 = vmatmul.f32.gmra.mxu0 %v255
        %v517 = vpop.f32.mrf.mxu0
        %v518 = vadd.f32 %v291, %v517
        %519 = vdwg.mxu0
        %v520 = vmax.f32 %v312, 0.0
        %v521 = vmax.f32 %v315, 0.0
        %v522 = vmax.f32 %v318, 0.0
        %v523 = vmax.f32 %v321, 0.0
        %v524 = vmax.f32 %v324, 0.0
        %v525 = vmax.f32 %v327, 0.0
        %v526 = vmax.f32 %v330, 0.0
        %v527 = vmax.f32 %v333, 0.0
        %v528 = vmax.f32 %v336, 0.0
        %v529 = vmax.f32 %v339, 0.0
        %v530 = vmax.f32 %v342, 0.0
        %v531 = vmax.f32 %v345, 0.0
        %v532 = vmax.f32 %v348, 0.0
        %v533 = vmax.f32 %v351, 0.0
        %v534 = vmax.f32 %v354, 0.0
        %v535 = vmax.f32 %v357, 0.0
        %v536 = vmax.f32 %v360, 0.0
        %v537 = vmax.f32 %v363, 0.0
        %v538 = vmax.f32 %v366, 0.0
        %v539 = vmax.f32 %v369, 0.0
        %v540 = vmax.f32 %v372, 0.0
        %v541 = vmax.f32 %v375, 0.0
        %v542 = vmax.f32 %v378, 0.0
        %v543 = vmax.f32 %v381, 0.0
        %v544 = vmax.f32 %v384, 0.0
        %v545 = vmax.f32 %v387, 0.0
        %v546 = vmax.f32 %v390, 0.0
        %v547 = vmax.f32 %v393, 0.0
        %v548 = vmax.f32 %v396, 0.0
        %v549 = vmax.f32 %v399, 0.0
        %v550 = vmax.f32 %v402, 0.0
        %v551 = vmax.f32 %v405, 0.0
        %v552 = vxor.u32 %v425, 2147483648
        %v553 = vxor.u32 %v428, 2147483648
        %v554 = vxor.u32 %v431, 2147483648
        %v555 = vxor.u32 %v434, 2147483648
        %v556 = vxor.u32 %v437, 2147483648
        %v557 = vxor.u32 %v440, 2147483648
        %v558 = vxor.u32 %v443, 2147483648
        %v559 = vxor.u32 %v446, 2147483648
        %v560 = vxor.u32 %v449, 2147483648
        %v561 = vxor.u32 %v452, 2147483648
        %v562 = vxor.u32 %v455, 2147483648
        %v563 = vxor.u32 %v458, 2147483648
        %v564 = vxor.u32 %v461, 2147483648
        %v565 = vxor.u32 %v464, 2147483648
        %v566 = vxor.u32 %v467, 2147483648
        %v567 = vxor.u32 %v470, 2147483648
        %v568 = vxor.u32 %v473, 2147483648
        %v569 = vxor.u32 %v476, 2147483648
        %v570 = vxor.u32 %v479, 2147483648
        %v571 = vxor.u32 %v482, 2147483648
        %v572 = vxor.u32 %v485, 2147483648
        %v573 = vxor.u32 %v488, 2147483648
        %v574 = vxor.u32 %v491, 2147483648
        %v575 = vxor.u32 %v494, 2147483648
        %v576 = vxor.u32 %v497, 2147483648
        %v577 = vxor.u32 %v500, 2147483648
        %v578 = vxor.u32 %v503, 2147483648
        %v579 = vxor.u32 %v506, 2147483648
        %v580 = vxor.u32 %v509, 2147483648
        %v581 = vxor.u32 %v512, 2147483648
        %v582 = vxor.u32 %v515, 2147483648
        %v583 = vxor.u32 %v518, 2147483648
        %v584 = vmul.f32 %v552, 1.442695
        %v585 = vpow.pop %v584
        %v586 = vmul.f32 %v553, 1.442695
        %v587 = vpow.pop %v586
        %v588 = vmul.f32 %v554, 1.442695
        %v589 = vpow.pop %v588
        %v590 = vmul.f32 %v555, 1.442695
        %v591 = vpow.pop %v590
        %v592 = vmul.f32 %v556, 1.442695
        %v593 = vpow.pop %v592
        %v594 = vmul.f32 %v557, 1.442695
        %v595 = vpow.pop %v594
        %v596 = vmul.f32 %v558, 1.442695
        %v597 = vpow.pop %v596
        %v598 = vmul.f32 %v559, 1.442695
        %v599 = vpow.pop %v598
        %v600 = vmul.f32 %v560, 1.442695
        %v601 = vpow.pop %v600
        %v602 = vmul.f32 %v561, 1.442695
        %v603 = vpow.pop %v602
        %v604 = vmul.f32 %v562, 1.442695
        %v605 = vpow.pop %v604
        %v606 = vmul.f32 %v563, 1.442695
        %v607 = vpow.pop %v606
        %v608 = vmul.f32 %v564, 1.442695
        %v609 = vpow.pop %v608
        %v610 = vmul.f32 %v565, 1.442695
        %v611 = vpow.pop %v610
        %v612 = vmul.f32 %v566, 1.442695
        %v613 = vpow.pop %v612
        %v614 = vmul.f32 %v567, 1.442695
        %v615 = vpow.pop %v614
        %v616 = vmul.f32 %v568, 1.442695
        %v617 = vpow.pop %v616
        %v618 = vmul.f32 %v569, 1.442695
        %v619 = vpow.pop %v618
        %v620 = vmul.f32 %v570, 1.442695
        %v621 = vpow.pop %v620
        %v622 = vmul.f32 %v571, 1.442695
        %v623 = vpow.pop %v622
        %v624 = vmul.f32 %v572, 1.442695
        %v625 = vpow.pop %v624
        %v626 = vmul.f32 %v573, 1.442695
        %v627 = vpow.pop %v626
        %v628 = vmul.f32 %v574, 1.442695
        %v629 = vpow.pop %v628
        %v630 = vmul.f32 %v575, 1.442695
        %v631 = vpow.pop %v630
        %v632 = vmul.f32 %v576, 1.442695
        %v633 = vpow.pop %v632
        %v634 = vmul.f32 %v577, 1.442695
        %v635 = vpow.pop %v634
        %v636 = vmul.f32 %v578, 1.442695
        %v637 = vpow.pop %v636
        %v638 = vmul.f32 %v579, 1.442695
        %v639 = vpow.pop %v638
        %v640 = vmul.f32 %v580, 1.442695
        %v641 = vpow.pop %v640
        %v642 = vmul.f32 %v581, 1.442695
        %v643 = vpow.pop %v642
        %v644 = vmul.f32 %v582, 1.442695
        %v645 = vpow.pop %v644
        %v646 = vmul.f32 %v583, 1.442695
        %v647 = vpow.pop %v646
        %v648 = vadd.f32 %v585, 1.0
        %v649 = vadd.f32 %v587, 1.0
        %v650 = vadd.f32 %v589, 1.0
        %v651 = vadd.f32 %v591, 1.0
        %v652 = vadd.f32 %v593, 1.0
        %v653 = vadd.f32 %v595, 1.0
        %v654 = vadd.f32 %v597, 1.0
        %v655 = vadd.f32 %v599, 1.0
        %v656 = vadd.f32 %v601, 1.0
        %v657 = vadd.f32 %v603, 1.0
        %v658 = vadd.f32 %v605, 1.0
        %v659 = vadd.f32 %v607, 1.0
        %v660 = vadd.f32 %v609, 1.0
        %v661 = vadd.f32 %v611, 1.0
        %v662 = vadd.f32 %v613, 1.0
        %v663 = vadd.f32 %v615, 1.0
        %v664 = vadd.f32 %v617, 1.0
        %v665 = vadd.f32 %v619, 1.0
        %v666 = vadd.f32 %v621, 1.0
        %v667 = vadd.f32 %v623, 1.0
        %v668 = vadd.f32 %v625, 1.0
        %v669 = vadd.f32 %v627, 1.0
        %v670 = vadd.f32 %v629, 1.0
        %v671 = vadd.f32 %v631, 1.0
        %v672 = vadd.f32 %v633, 1.0
        %v673 = vadd.f32 %v635, 1.0
        %v674 = vadd.f32 %v637, 1.0
        %v675 = vadd.f32 %v639, 1.0
        %v676 = vadd.f32 %v641, 1.0
        %v677 = vadd.f32 %v643, 1.0
        %v678 = vadd.f32 %v645, 1.0
        %v679 = vadd.f32 %v647, 1.0
        %v680 = vrcp.pop %v648
        %v681 = vmul.f32 %v648, %v680
        %v682 = vsub.f32 1.0, %v681
        %v683 = vmul.f32 %v680, %v682
        %v684 = vadd.f32 %v680, %v683
        %vm685 = vweird.f32 %v648
        %vm686 = vweird.f32 %v680
        %vm687 = vmor %vm685, %vm686
        %v688 = vsel %vm687, %v680, %v684
        %v689 = vand.u32 2147483647, %v648
        %vm690 = vcmp.eq.f32.partialorder %v689, 8.507059e+37
        %v691 = vand.u32 %v648, 2147483648
        %v692 = vor.u32 1.1754944e-38, %v691
        %v693 = vsel %vm690, %v692, %v688
        %v694 = vmul.f32 1.0, %v693
        %v695 = vrcp.pop %v649
        %v696 = vmul.f32 %v649, %v695
        %v697 = vsub.f32 1.0, %v696
        %v698 = vmul.f32 %v695, %v697
        %v699 = vadd.f32 %v695, %v698
        %vm700 = vweird.f32 %v649
        %vm701 = vweird.f32 %v695
        %vm702 = vmor %vm700, %vm701
        %v703 = vsel %vm702, %v695, %v699
        %v704 = vand.u32 2147483647, %v649
        %vm705 = vcmp.eq.f32.partialorder %v704, 8.507059e+37
        %v706 = vand.u32 %v649, 2147483648
        %v707 = vor.u32 1.1754944e-38, %v706
        %v708 = vsel %vm705, %v707, %v703
        %v709 = vmul.f32 1.0, %v708
        %v710 = vrcp.pop %v650
        %v711 = vmul.f32 %v650, %v710
        %v712 = vsub.f32 1.0, %v711
        %v713 = vmul.f32 %v710, %v712
        %v714 = vadd.f32 %v710, %v713
        %vm715 = vweird.f32 %v650
        %vm716 = vweird.f32 %v710
        %vm717 = vmor %vm715, %vm716
        %v718 = vsel %vm717, %v710, %v714
        %v719 = vand.u32 2147483647, %v650
        %vm720 = vcmp.eq.f32.partialorder %v719, 8.507059e+37
        %v721 = vand.u32 %v650, 2147483648
        %v722 = vor.u32 1.1754944e-38, %v721
        %v723 = vsel %vm720, %v722, %v718
        %v724 = vmul.f32 1.0, %v723
        %v725 = vrcp.pop %v651
        %v726 = vmul.f32 %v651, %v725
        %v727 = vsub.f32 1.0, %v726
        %v728 = vmul.f32 %v725, %v727
        %v729 = vadd.f32 %v725, %v728
        %vm730 = vweird.f32 %v651
        %vm731 = vweird.f32 %v725
        %vm732 = vmor %vm730, %vm731
        %v733 = vsel %vm732, %v725, %v729
        %v734 = vand.u32 2147483647, %v651
        %vm735 = vcmp.eq.f32.partialorder %v734, 8.507059e+37
        %v736 = vand.u32 %v651, 2147483648
        %v737 = vor.u32 1.1754944e-38, %v736
        %v738 = vsel %vm735, %v737, %v733
        %v739 = vmul.f32 1.0, %v738
        %v740 = vrcp.pop %v652
        %v741 = vmul.f32 %v652, %v740
        %v742 = vsub.f32 1.0, %v741
        %v743 = vmul.f32 %v740, %v742
        %v744 = vadd.f32 %v740, %v743
        %vm745 = vweird.f32 %v652
        %vm746 = vweird.f32 %v740
        %vm747 = vmor %vm745, %vm746
        %v748 = vsel %vm747, %v740, %v744
        %v749 = vand.u32 2147483647, %v652
        %vm750 = vcmp.eq.f32.partialorder %v749, 8.507059e+37
        %v751 = vand.u32 %v652, 2147483648
        %v752 = vor.u32 1.1754944e-38, %v751
        %v753 = vsel %vm750, %v752, %v748
        %v754 = vmul.f32 1.0, %v753
        %v755 = vrcp.pop %v653
        %v756 = vmul.f32 %v653, %v755
        %v757 = vsub.f32 1.0, %v756
        %v758 = vmul.f32 %v755, %v757
        %v759 = vadd.f32 %v755, %v758
        %vm760 = vweird.f32 %v653
        %vm761 = vweird.f32 %v755
        %vm762 = vmor %vm760, %vm761
        %v763 = vsel %vm762, %v755, %v759
        %v764 = vand.u32 2147483647, %v653
        %vm765 = vcmp.eq.f32.partialorder %v764, 8.507059e+37
        %v766 = vand.u32 %v653, 2147483648
        %v767 = vor.u32 1.1754944e-38, %v766
        %v768 = vsel %vm765, %v767, %v763
        %v769 = vmul.f32 1.0, %v768
        %v770 = vrcp.pop %v654
        %v771 = vmul.f32 %v654, %v770
        %v772 = vsub.f32 1.0, %v771
        %v773 = vmul.f32 %v770, %v772
        %v774 = vadd.f32 %v770, %v773
        %vm775 = vweird.f32 %v654
        %vm776 = vweird.f32 %v770
        %vm777 = vmor %vm775, %vm776
        %v778 = vsel %vm777, %v770, %v774
        %v779 = vand.u32 2147483647, %v654
        %vm780 = vcmp.eq.f32.partialorder %v779, 8.507059e+37
        %v781 = vand.u32 %v654, 2147483648
        %v782 = vor.u32 1.1754944e-38, %v781
        %v783 = vsel %vm780, %v782, %v778
        %v784 = vmul.f32 1.0, %v783
        %v785 = vrcp.pop %v655
        %v786 = vmul.f32 %v655, %v785
        %v787 = vsub.f32 1.0, %v786
        %v788 = vmul.f32 %v785, %v787
        %v789 = vadd.f32 %v785, %v788
        %vm790 = vweird.f32 %v655
        %vm791 = vweird.f32 %v785
        %vm792 = vmor %vm790, %vm791
        %v793 = vsel %vm792, %v785, %v789
        %v794 = vand.u32 2147483647, %v655
        %vm795 = vcmp.eq.f32.partialorder %v794, 8.507059e+37
        %v796 = vand.u32 %v655, 2147483648
        %v797 = vor.u32 1.1754944e-38, %v796
        %v798 = vsel %vm795, %v797, %v793
        %v799 = vmul.f32 1.0, %v798
        %v800 = vrcp.pop %v656
        %v801 = vmul.f32 %v656, %v800
        %v802 = vsub.f32 1.0, %v801
        %v803 = vmul.f32 %v800, %v802
        %v804 = vadd.f32 %v800, %v803
        %vm805 = vweird.f32 %v656
        %vm806 = vweird.f32 %v800
        %vm807 = vmor %vm805, %vm806
        %v808 = vsel %vm807, %v800, %v804
        %v809 = vand.u32 2147483647, %v656
        %vm810 = vcmp.eq.f32.partialorder %v809, 8.507059e+37
        %v811 = vand.u32 %v656, 2147483648
        %v812 = vor.u32 1.1754944e-38, %v811
        %v813 = vsel %vm810, %v812, %v808
        %v814 = vmul.f32 1.0, %v813
        %v815 = vrcp.pop %v657
        %v816 = vmul.f32 %v657, %v815
        %v817 = vsub.f32 1.0, %v816
        %v818 = vmul.f32 %v815, %v817
        %v819 = vadd.f32 %v815, %v818
        %vm820 = vweird.f32 %v657
        %vm821 = vweird.f32 %v815
        %vm822 = vmor %vm820, %vm821
        %v823 = vsel %vm822, %v815, %v819
        %v824 = vand.u32 2147483647, %v657
        %vm825 = vcmp.eq.f32.partialorder %v824, 8.507059e+37
        %v826 = vand.u32 %v657, 2147483648
        %v827 = vor.u32 1.1754944e-38, %v826
        %v828 = vsel %vm825, %v827, %v823
        %v829 = vmul.f32 1.0, %v828
        %v830 = vrcp.pop %v658
        %v831 = vmul.f32 %v658, %v830
        %v832 = vsub.f32 1.0, %v831
        %v833 = vmul.f32 %v830, %v832
        %v834 = vadd.f32 %v830, %v833
        %vm835 = vweird.f32 %v658
        %vm836 = vweird.f32 %v830
        %vm837 = vmor %vm835, %vm836
        %v838 = vsel %vm837, %v830, %v834
        %v839 = vand.u32 2147483647, %v658
        %vm840 = vcmp.eq.f32.partialorder %v839, 8.507059e+37
        %v841 = vand.u32 %v658, 2147483648
        %v842 = vor.u32 1.1754944e-38, %v841
        %v843 = vsel %vm840, %v842, %v838
        %v844 = vmul.f32 1.0, %v843
        %v845 = vrcp.pop %v659
        %v846 = vmul.f32 %v659, %v845
        %v847 = vsub.f32 1.0, %v846
        %v848 = vmul.f32 %v845, %v847
        %v849 = vadd.f32 %v845, %v848
        %vm850 = vweird.f32 %v659
        %vm851 = vweird.f32 %v845
        %vm852 = vmor %vm850, %vm851
        %v853 = vsel %vm852, %v845, %v849
        %v854 = vand.u32 2147483647, %v659
        %vm855 = vcmp.eq.f32.partialorder %v854, 8.507059e+37
        %v856 = vand.u32 %v659, 2147483648
        %v857 = vor.u32 1.1754944e-38, %v856
        %v858 = vsel %vm855, %v857, %v853
        %v859 = vmul.f32 1.0, %v858
        %v860 = vrcp.pop %v660
        %v861 = vmul.f32 %v660, %v860
        %v862 = vsub.f32 1.0, %v861
        %v863 = vmul.f32 %v860, %v862
        %v864 = vadd.f32 %v860, %v863
        %vm865 = vweird.f32 %v660
        %vm866 = vweird.f32 %v860
        %vm867 = vmor %vm865, %vm866
        %v868 = vsel %vm867, %v860, %v864
        %v869 = vand.u32 2147483647, %v660
        %vm870 = vcmp.eq.f32.partialorder %v869, 8.507059e+37
        %v871 = vand.u32 %v660, 2147483648
        %v872 = vor.u32 1.1754944e-38, %v871
        %v873 = vsel %vm870, %v872, %v868
        %v874 = vmul.f32 1.0, %v873
        %v875 = vrcp.pop %v661
        %v876 = vmul.f32 %v661, %v875
        %v877 = vsub.f32 1.0, %v876
        %v878 = vmul.f32 %v875, %v877
        %v879 = vadd.f32 %v875, %v878
        %vm880 = vweird.f32 %v661
        %vm881 = vweird.f32 %v875
        %vm882 = vmor %vm880, %vm881
        %v883 = vsel %vm882, %v875, %v879
        %v884 = vand.u32 2147483647, %v661
        %vm885 = vcmp.eq.f32.partialorder %v884, 8.507059e+37
        %v886 = vand.u32 %v661, 2147483648
        %v887 = vor.u32 1.1754944e-38, %v886
        %v888 = vsel %vm885, %v887, %v883
        %v889 = vmul.f32 1.0, %v888
        %v890 = vrcp.pop %v662
        %v891 = vmul.f32 %v662, %v890
        %v892 = vsub.f32 1.0, %v891
        %v893 = vmul.f32 %v890, %v892
        %v894 = vadd.f32 %v890, %v893
        %vm895 = vweird.f32 %v662
        %vm896 = vweird.f32 %v890
        %vm897 = vmor %vm895, %vm896
        %v898 = vsel %vm897, %v890, %v894
        %v899 = vand.u32 2147483647, %v662
        %vm900 = vcmp.eq.f32.partialorder %v899, 8.507059e+37
        %v901 = vand.u32 %v662, 2147483648
        %v902 = vor.u32 1.1754944e-38, %v901
        %v903 = vsel %vm900, %v902, %v898
        %v904 = vmul.f32 1.0, %v903
        %v905 = vrcp.pop %v663
        %v906 = vmul.f32 %v663, %v905
        %v907 = vsub.f32 1.0, %v906
        %v908 = vmul.f32 %v905, %v907
        %v909 = vadd.f32 %v905, %v908
        %vm910 = vweird.f32 %v663
        %vm911 = vweird.f32 %v905
        %vm912 = vmor %vm910, %vm911
        %v913 = vsel %vm912, %v905, %v909
        %v914 = vand.u32 2147483647, %v663
        %vm915 = vcmp.eq.f32.partialorder %v914, 8.507059e+37
        %v916 = vand.u32 %v663, 2147483648
        %v917 = vor.u32 1.1754944e-38, %v916
        %v918 = vsel %vm915, %v917, %v913
        %v919 = vmul.f32 1.0, %v918
        %v920 = vrcp.pop %v664
        %v921 = vmul.f32 %v664, %v920
        %v922 = vsub.f32 1.0, %v921
        %v923 = vmul.f32 %v920, %v922
        %v924 = vadd.f32 %v920, %v923
        %vm925 = vweird.f32 %v664
        %vm926 = vweird.f32 %v920
        %vm927 = vmor %vm925, %vm926
        %v928 = vsel %vm927, %v920, %v924
        %v929 = vand.u32 2147483647, %v664
        %vm930 = vcmp.eq.f32.partialorder %v929, 8.507059e+37
        %v931 = vand.u32 %v664, 2147483648
        %v932 = vor.u32 1.1754944e-38, %v931
        %v933 = vsel %vm930, %v932, %v928
        %v934 = vmul.f32 1.0, %v933
        %v935 = vrcp.pop %v665
        %v936 = vmul.f32 %v665, %v935
        %v937 = vsub.f32 1.0, %v936
        %v938 = vmul.f32 %v935, %v937
        %v939 = vadd.f32 %v935, %v938
        %vm940 = vweird.f32 %v665
        %vm941 = vweird.f32 %v935
        %vm942 = vmor %vm940, %vm941
        %v943 = vsel %vm942, %v935, %v939
        %v944 = vand.u32 2147483647, %v665
        %vm945 = vcmp.eq.f32.partialorder %v944, 8.507059e+37
        %v946 = vand.u32 %v665, 2147483648
        %v947 = vor.u32 1.1754944e-38, %v946
        %v948 = vsel %vm945, %v947, %v943
        %v949 = vmul.f32 1.0, %v948
        %v950 = vrcp.pop %v666
        %v951 = vmul.f32 %v666, %v950
        %v952 = vsub.f32 1.0, %v951
        %v953 = vmul.f32 %v950, %v952
        %v954 = vadd.f32 %v950, %v953
        %vm955 = vweird.f32 %v666
        %vm956 = vweird.f32 %v950
        %vm957 = vmor %vm955, %vm956
        %v958 = vsel %vm957, %v950, %v954
        %v959 = vand.u32 2147483647, %v666
        %vm960 = vcmp.eq.f32.partialorder %v959, 8.507059e+37
        %v961 = vand.u32 %v666, 2147483648
        %v962 = vor.u32 1.1754944e-38, %v961
        %v963 = vsel %vm960, %v962, %v958
        %v964 = vmul.f32 1.0, %v963
        %v965 = vrcp.pop %v667
        %v966 = vmul.f32 %v667, %v965
        %v967 = vsub.f32 1.0, %v966
        %v968 = vmul.f32 %v965, %v967
        %v969 = vadd.f32 %v965, %v968
        %vm970 = vweird.f32 %v667
        %vm971 = vweird.f32 %v965
        %vm972 = vmor %vm970, %vm971
        %v973 = vsel %vm972, %v965, %v969
        %v974 = vand.u32 2147483647, %v667
        %vm975 = vcmp.eq.f32.partialorder %v974, 8.507059e+37
        %v976 = vand.u32 %v667, 2147483648
        %v977 = vor.u32 1.1754944e-38, %v976
        %v978 = vsel %vm975, %v977, %v973
        %v979 = vmul.f32 1.0, %v978
        %v980 = vrcp.pop %v668
        %v981 = vmul.f32 %v668, %v980
        %v982 = vsub.f32 1.0, %v981
        %v983 = vmul.f32 %v980, %v982
        %v984 = vadd.f32 %v980, %v983
        %vm985 = vweird.f32 %v668
        %vm986 = vweird.f32 %v980
        %vm987 = vmor %vm985, %vm986
        %v988 = vsel %vm987, %v980, %v984
        %v989 = vand.u32 2147483647, %v668
        %vm990 = vcmp.eq.f32.partialorder %v989, 8.507059e+37
        %v991 = vand.u32 %v668, 2147483648
        %v992 = vor.u32 1.1754944e-38, %v991
        %v993 = vsel %vm990, %v992, %v988
        %v994 = vmul.f32 1.0, %v993
        %v995 = vrcp.pop %v669
        %v996 = vmul.f32 %v669, %v995
        %v997 = vsub.f32 1.0, %v996
        %v998 = vmul.f32 %v995, %v997
        %v999 = vadd.f32 %v995, %v998
        %vm1000 = vweird.f32 %v669
        %vm1001 = vweird.f32 %v995
        %vm1002 = vmor %vm1000, %vm1001
        %v1003 = vsel %vm1002, %v995, %v999
        %v1004 = vand.u32 2147483647, %v669
        %vm1005 = vcmp.eq.f32.partialorder %v1004, 8.507059e+37
        %v1006 = vand.u32 %v669, 2147483648
        %v1007 = vor.u32 1.1754944e-38, %v1006
        %v1008 = vsel %vm1005, %v1007, %v1003
        %v1009 = vmul.f32 1.0, %v1008
        %v1010 = vrcp.pop %v670
        %v1011 = vmul.f32 %v670, %v1010
        %v1012 = vsub.f32 1.0, %v1011
        %v1013 = vmul.f32 %v1010, %v1012
        %v1014 = vadd.f32 %v1010, %v1013
        %vm1015 = vweird.f32 %v670
        %vm1016 = vweird.f32 %v1010
        %vm1017 = vmor %vm1015, %vm1016
        %v1018 = vsel %vm1017, %v1010, %v1014
        %v1019 = vand.u32 2147483647, %v670
        %vm1020 = vcmp.eq.f32.partialorder %v1019, 8.507059e+37
        %v1021 = vand.u32 %v670, 2147483648
        %v1022 = vor.u32 1.1754944e-38, %v1021
        %v1023 = vsel %vm1020, %v1022, %v1018
        %v1024 = vmul.f32 1.0, %v1023
        %v1025 = vrcp.pop %v671
        %v1026 = vmul.f32 %v671, %v1025
        %v1027 = vsub.f32 1.0, %v1026
        %v1028 = vmul.f32 %v1025, %v1027
        %v1029 = vadd.f32 %v1025, %v1028
        %vm1030 = vweird.f32 %v671
        %vm1031 = vweird.f32 %v1025
        %vm1032 = vmor %vm1030, %vm1031
        %v1033 = vsel %vm1032, %v1025, %v1029
        %v1034 = vand.u32 2147483647, %v671
        %vm1035 = vcmp.eq.f32.partialorder %v1034, 8.507059e+37
        %v1036 = vand.u32 %v671, 2147483648
        %v1037 = vor.u32 1.1754944e-38, %v1036
        %v1038 = vsel %vm1035, %v1037, %v1033
        %v1039 = vmul.f32 1.0, %v1038
        %v1040 = vrcp.pop %v672
        %v1041 = vmul.f32 %v672, %v1040
        %v1042 = vsub.f32 1.0, %v1041
        %v1043 = vmul.f32 %v1040, %v1042
        %v1044 = vadd.f32 %v1040, %v1043
        %vm1045 = vweird.f32 %v672
        %vm1046 = vweird.f32 %v1040
        %vm1047 = vmor %vm1045, %vm1046
        %v1048 = vsel %vm1047, %v1040, %v1044
        %v1049 = vand.u32 2147483647, %v672
        %vm1050 = vcmp.eq.f32.partialorder %v1049, 8.507059e+37
        %v1051 = vand.u32 %v672, 2147483648
        %v1052 = vor.u32 1.1754944e-38, %v1051
        %v1053 = vsel %vm1050, %v1052, %v1048
        %v1054 = vmul.f32 1.0, %v1053
        %v1055 = vrcp.pop %v673
        %v1056 = vmul.f32 %v673, %v1055
        %v1057 = vsub.f32 1.0, %v1056
        %v1058 = vmul.f32 %v1055, %v1057
        %v1059 = vadd.f32 %v1055, %v1058
        %vm1060 = vweird.f32 %v673
        %vm1061 = vweird.f32 %v1055
        %vm1062 = vmor %vm1060, %vm1061
        %v1063 = vsel %vm1062, %v1055, %v1059
        %v1064 = vand.u32 2147483647, %v673
        %vm1065 = vcmp.eq.f32.partialorder %v1064, 8.507059e+37
        %v1066 = vand.u32 %v673, 2147483648
        %v1067 = vor.u32 1.1754944e-38, %v1066
        %v1068 = vsel %vm1065, %v1067, %v1063
        %v1069 = vmul.f32 1.0, %v1068
        %v1070 = vrcp.pop %v674
        %v1071 = vmul.f32 %v674, %v1070
        %v1072 = vsub.f32 1.0, %v1071
        %v1073 = vmul.f32 %v1070, %v1072
        %v1074 = vadd.f32 %v1070, %v1073
        %vm1075 = vweird.f32 %v674
        %vm1076 = vweird.f32 %v1070
        %vm1077 = vmor %vm1075, %vm1076
        %v1078 = vsel %vm1077, %v1070, %v1074
        %v1079 = vand.u32 2147483647, %v674
        %vm1080 = vcmp.eq.f32.partialorder %v1079, 8.507059e+37
        %v1081 = vand.u32 %v674, 2147483648
        %v1082 = vor.u32 1.1754944e-38, %v1081
        %v1083 = vsel %vm1080, %v1082, %v1078
        %v1084 = vmul.f32 1.0, %v1083
        %v1085 = vrcp.pop %v675
        %v1086 = vmul.f32 %v675, %v1085
        %v1087 = vsub.f32 1.0, %v1086
        %v1088 = vmul.f32 %v1085, %v1087
        %v1089 = vadd.f32 %v1085, %v1088
        %vm1090 = vweird.f32 %v675
        %vm1091 = vweird.f32 %v1085
        %vm1092 = vmor %vm1090, %vm1091
        %v1093 = vsel %vm1092, %v1085, %v1089
        %v1094 = vand.u32 2147483647, %v675
        %vm1095 = vcmp.eq.f32.partialorder %v1094, 8.507059e+37
        %v1096 = vand.u32 %v675, 2147483648
        %v1097 = vor.u32 1.1754944e-38, %v1096
        %v1098 = vsel %vm1095, %v1097, %v1093
        %v1099 = vmul.f32 1.0, %v1098
        %v1100 = vrcp.pop %v676
        %v1101 = vmul.f32 %v676, %v1100
        %v1102 = vsub.f32 1.0, %v1101
        %v1103 = vmul.f32 %v1100, %v1102
        %v1104 = vadd.f32 %v1100, %v1103
        %vm1105 = vweird.f32 %v676
        %vm1106 = vweird.f32 %v1100
        %vm1107 = vmor %vm1105, %vm1106
        %v1108 = vsel %vm1107, %v1100, %v1104
        %v1109 = vand.u32 2147483647, %v676
        %vm1110 = vcmp.eq.f32.partialorder %v1109, 8.507059e+37
        %v1111 = vand.u32 %v676, 2147483648
        %v1112 = vor.u32 1.1754944e-38, %v1111
        %v1113 = vsel %vm1110, %v1112, %v1108
        %v1114 = vmul.f32 1.0, %v1113
        %v1115 = vrcp.pop %v677
        %v1116 = vmul.f32 %v677, %v1115
        %v1117 = vsub.f32 1.0, %v1116
        %v1118 = vmul.f32 %v1115, %v1117
        %v1119 = vadd.f32 %v1115, %v1118
        %vm1120 = vweird.f32 %v677
        %vm1121 = vweird.f32 %v1115
        %vm1122 = vmor %vm1120, %vm1121
        %v1123 = vsel %vm1122, %v1115, %v1119
        %v1124 = vand.u32 2147483647, %v677
        %vm1125 = vcmp.eq.f32.partialorder %v1124, 8.507059e+37
        %v1126 = vand.u32 %v677, 2147483648
        %v1127 = vor.u32 1.1754944e-38, %v1126
        %v1128 = vsel %vm1125, %v1127, %v1123
        %v1129 = vmul.f32 1.0, %v1128
        %v1130 = vrcp.pop %v678
        %v1131 = vmul.f32 %v678, %v1130
        %v1132 = vsub.f32 1.0, %v1131
        %v1133 = vmul.f32 %v1130, %v1132
        %v1134 = vadd.f32 %v1130, %v1133
        %vm1135 = vweird.f32 %v678
        %vm1136 = vweird.f32 %v1130
        %vm1137 = vmor %vm1135, %vm1136
        %v1138 = vsel %vm1137, %v1130, %v1134
        %v1139 = vand.u32 2147483647, %v678
        %vm1140 = vcmp.eq.f32.partialorder %v1139, 8.507059e+37
        %v1141 = vand.u32 %v678, 2147483648
        %v1142 = vor.u32 1.1754944e-38, %v1141
        %v1143 = vsel %vm1140, %v1142, %v1138
        %v1144 = vmul.f32 1.0, %v1143
        %v1145 = vrcp.pop %v679
        %v1146 = vmul.f32 %v679, %v1145
        %v1147 = vsub.f32 1.0, %v1146
        %v1148 = vmul.f32 %v1145, %v1147
        %v1149 = vadd.f32 %v1145, %v1148
        %vm1150 = vweird.f32 %v679
        %vm1151 = vweird.f32 %v1145
        %vm1152 = vmor %vm1150, %vm1151
        %v1153 = vsel %vm1152, %v1145, %v1149
        %v1154 = vand.u32 2147483647, %v679
        %vm1155 = vcmp.eq.f32.partialorder %v1154, 8.507059e+37
        %v1156 = vand.u32 %v679, 2147483648
        %v1157 = vor.u32 1.1754944e-38, %v1156
        %v1158 = vsel %vm1155, %v1157, %v1153
        %v1159 = vmul.f32 1.0, %v1158
        %v1160 = vsub.f32 %v520, %v224
        %v1161 = vsub.f32 %v521, %v225
        %v1162 = vsub.f32 %v522, %v226
        %v1163 = vsub.f32 %v523, %v227
        %v1164 = vsub.f32 %v524, %v228
        %v1165 = vsub.f32 %v525, %v229
        %v1166 = vsub.f32 %v526, %v230
        %v1167 = vsub.f32 %v527, %v231
        %v1168 = vsub.f32 %v528, %v232
        %v1169 = vsub.f32 %v529, %v233
        %v1170 = vsub.f32 %v530, %v234
        %v1171 = vsub.f32 %v531, %v235
        %v1172 = vsub.f32 %v532, %v236
        %v1173 = vsub.f32 %v533, %v237
        %v1174 = vsub.f32 %v534, %v238
        %v1175 = vsub.f32 %v535, %v239
        %v1176 = vsub.f32 %v536, %v240
        %v1177 = vsub.f32 %v537, %v241
        %v1178 = vsub.f32 %v538, %v242
        %v1179 = vsub.f32 %v539, %v243
        %v1180 = vsub.f32 %v540, %v244
        %v1181 = vsub.f32 %v541, %v245
        %v1182 = vsub.f32 %v542, %v246
        %v1183 = vsub.f32 %v543, %v247
        %v1184 = vsub.f32 %v544, %v248
        %v1185 = vsub.f32 %v545, %v249
        %v1186 = vsub.f32 %v546, %v250
        %v1187 = vsub.f32 %v547, %v251
        %v1188 = vsub.f32 %v548, %v252
        %v1189 = vsub.f32 %v549, %v253
        %v1190 = vsub.f32 %v550, %v254
        %v1191 = vsub.f32 %v551, %v255
        %v1192 = vmul.f32 %v694, %v1160
        %v1193 = vmul.f32 %v709, %v1161
        %v1194 = vmul.f32 %v724, %v1162
        %v1195 = vmul.f32 %v739, %v1163
        %v1196 = vmul.f32 %v754, %v1164
        %v1197 = vmul.f32 %v769, %v1165
        %v1198 = vmul.f32 %v784, %v1166
        %v1199 = vmul.f32 %v799, %v1167
        %v1200 = vmul.f32 %v814, %v1168
        %v1201 = vmul.f32 %v829, %v1169
        %v1202 = vmul.f32 %v844, %v1170
        %v1203 = vmul.f32 %v859, %v1171
        %v1204 = vmul.f32 %v874, %v1172
        %v1205 = vmul.f32 %v889, %v1173
        %v1206 = vmul.f32 %v904, %v1174
        %v1207 = vmul.f32 %v919, %v1175
        %v1208 = vmul.f32 %v934, %v1176
        %v1209 = vmul.f32 %v949, %v1177
        %v1210 = vmul.f32 %v964, %v1178
        %v1211 = vmul.f32 %v979, %v1179
        %v1212 = vmul.f32 %v994, %v1180
        %v1213 = vmul.f32 %v1009, %v1181
        %v1214 = vmul.f32 %v1024, %v1182
        %v1215 = vmul.f32 %v1039, %v1183
        %v1216 = vmul.f32 %v1054, %v1184
        %v1217 = vmul.f32 %v1069, %v1185
        %v1218 = vmul.f32 %v1084, %v1186
        %v1219 = vmul.f32 %v1099, %v1187
        %v1220 = vmul.f32 %v1114, %v1188
        %v1221 = vmul.f32 %v1129, %v1189
        %v1222 = vmul.f32 %v1144, %v1190
        %v1223 = vmul.f32 %v1159, %v1191
        %v1224 = vadd.f32 %v224, %v1192
        %v1225 = vadd.f32 %v225, %v1193
        %v1226 = vadd.f32 %v226, %v1194
        %v1227 = vadd.f32 %v227, %v1195
        %v1228 = vadd.f32 %v228, %v1196
        %v1229 = vadd.f32 %v229, %v1197
        %v1230 = vadd.f32 %v230, %v1198
        %v1231 = vadd.f32 %v231, %v1199
        %v1232 = vadd.f32 %v232, %v1200
        %v1233 = vadd.f32 %v233, %v1201
        %v1234 = vadd.f32 %v234, %v1202
        %v1235 = vadd.f32 %v235, %v1203
        %v1236 = vadd.f32 %v236, %v1204
        %v1237 = vadd.f32 %v237, %v1205
        %v1238 = vadd.f32 %v238, %v1206
        %v1239 = vadd.f32 %v239, %v1207
        %v1240 = vadd.f32 %v240, %v1208
        %v1241 = vadd.f32 %v241, %v1209
        %v1242 = vadd.f32 %v242, %v1210
        %v1243 = vadd.f32 %v243, %v1211
        %v1244 = vadd.f32 %v244, %v1212
        %v1245 = vadd.f32 %v245, %v1213
        %v1246 = vadd.f32 %v246, %v1214
        %v1247 = vadd.f32 %v247, %v1215
        %v1248 = vadd.f32 %v248, %v1216
        %v1249 = vadd.f32 %v249, %v1217
        %v1250 = vadd.f32 %v250, %v1218
        %v1251 = vadd.f32 %v251, %v1219
        %v1252 = vadd.f32 %v252, %v1220
        %v1253 = vadd.f32 %v253, %v1221
        %v1254 = vadd.f32 %v254, %v1222
        %v1255 = vadd.f32 %v255, %v1223
        %1256 = vst [vmem:[%s221] sm:$0xff] %v1224
        %1257 = vst [vmem:[%s221 + $0x8] sm:$0xff] %v1225
        %1258 = vst [vmem:[%s221 + $0x10] sm:$0xff] %v1226
        %1259 = vst [vmem:[%s221 + $0x18] sm:$0xff] %v1227
        %1260 = vst [vmem:[%s221 + $0x20] sm:$0xff] %v1228
        %1261 = vst [vmem:[%s221 + $0x28] sm:$0xff] %v1229
        %1262 = vst [vmem:[%s221 + $0x30] sm:$0xff] %v1230
        %1263 = vst [vmem:[%s221 + $0x38] sm:$0xff] %v1231
        %1264 = vst [vmem:[%s221 + $0x40] sm:$0xff] %v1232
        %1265 = vst [vmem:[%s221 + $0x48] sm:$0xff] %v1233
        %1266 = vst [vmem:[%s221 + $0x50] sm:$0xff] %v1234
        %1267 = vst [vmem:[%s221 + $0x58] sm:$0xff] %v1235
        %1268 = vst [vmem:[%s221 + $0x60] sm:$0xff] %v1236
        %1269 = vst [vmem:[%s221 + $0x68] sm:$0xff] %v1237
        %1270 = vst [vmem:[%s221 + $0x70] sm:$0xff] %v1238
        %1271 = vst [vmem:[%s221 + $0x78] sm:$0xff] %v1239
        %1272 = vst [vmem:[%s221 + $0x80] sm:$0xff] %v1240
        %1273 = vst [vmem:[%s221 + $0x88] sm:$0xff] %v1241
        %1274 = vst [vmem:[%s221 + $0x90] sm:$0xff] %v1242
        %1275 = vst [vmem:[%s221 + $0x98] sm:$0xff] %v1243
        %1276 = vst [vmem:[%s221 + $0xa0] sm:$0xff] %v1244
        %1277 = vst [vmem:[%s221 + $0xa8] sm:$0xff] %v1245
        %1278 = vst [vmem:[%s221 + $0xb0] sm:$0xff] %v1246
        %1279 = vst [vmem:[%s221 + $0xb8] sm:$0xff] %v1247
        %1280 = vst [vmem:[%s221 + $0xc0] sm:$0xff] %v1248
        %1281 = vst [vmem:[%s221 + $0xc8] sm:$0xff] %v1249
        %1282 = vst [vmem:[%s221 + $0xd0] sm:$0xff] %v1250
        %1283 = vst [vmem:[%s221 + $0xd8] sm:$0xff] %v1251
        %1284 = vst [vmem:[%s221 + $0xe0] sm:$0xff] %v1252
        %1285 = vst [vmem:[%s221 + $0xe8] sm:$0xff] %v1253
        %1286 = vst [vmem:[%s221 + $0xf0] sm:$0xff] %v1254
        %1287 = vst [vmem:[%s221 + $0xf8] sm:$0xff] %v1255
        %s1288 = sand.u32 %s97, 1
        %s1289 = scalar_lea.sflag [#allocation4], %s1288
        %s1290 = sand.u32 %s97, 1
        %s1291 = smul.addr %s1290, 256
        %s1292 = scalar_lea.vmem [#allocation8], %s1291
        // Predicated region
        $region45: #{tpu_custom_call.1} parent=31 // pred_check
          %p1293 = pneg %p107
        $region46: #{tpu_custom_call.1} parent=31 // pred_check_branch
          %1295 = sbr.rel (%p1293) target = $region48
        $region47: #{tpu_custom_call.1} parent=31 // pred_region
          %s1296 = smul.u32 32, %s21
          %1298 = vsyncadd %s1289, 0
          %s1299 = smul.addr %s1296, 8
          %s1300 = scalar_lea.hbm %s3, %s1299
          %s1301 = sshll.u32 %s1292, 4
          %s1302 = int_to_ptr.vmem [resolvable:$true] %s1301
          %s1303 = sshll.u32 %s1300, 4
          %s1304 = int_to_ptr.hbm [resolvable:$true] %s1303
          %1309 = dma.vmem_to_hbm [thread:$0]  %s1302, 4096, %s1304, %s1289, 128, 128, 8
        $region48: #{tpu_custom_call.1} parent=31 // pred_fallthru
          _
      $region32: #{tpu_custom_call.1} parent=5 // pred_fallthru
        _
      %p1310 = scmp.le.s32.totalorder 2, %s16
      // Predicated region
      $region49: #{tpu_custom_call.1} parent=5 // pred_check
        %p1311 = pneg %p1310
      $region50: #{tpu_custom_call.1} parent=5 // pred_check_branch
        %1313 = sbr.rel (%p1311) target = $region52
      $region51: #{tpu_custom_call.1} parent=5 // pred_region
        %s1314 = ssub.s32 %s16, 2
        // Predicated region
        $region53: #{tpu_custom_call.1} parent=51 // pred_check
          %p1315 = pneg %p113
        $region54: #{tpu_custom_call.1} parent=51 // pred_check_branch
          %1317 = sbr.rel (%p1315) target = $region56
        $region55: #{tpu_custom_call.1} parent=51 // pred_region
          %s1318 = sand.u32 %s98, 1
          %s1319 = scalar_lea.sflag [#allocation4], %s1318
          %s1320 = sand.u32 %s98, 1
          %s1321 = smul.addr %s1320, 256
          %s1322 = scalar_lea.vmem [#allocation8], %s1321
          %1324 = dma.done %s1319, 4096
        $region56: #{tpu_custom_call.1} parent=51 // pred_fallthru
          _
      $region52: #{tpu_custom_call.1} parent=5 // pred_fallthru
        _
    $region6: #{tpu_custom_call.1} parent=1 // loop_footer
      %s20 = sadd.s32 1, %s16
    $region7: #{tpu_custom_call.1} parent=1 // loop_footer_branch
      %15 = sbr.rel target = $region3
    $region8: #{tpu_custom_call.1} parent=1 // loop_exit
      _
    %1325 = vsyncpa [#allocation3], 1
    %s1326 = scalar_lea.sflag [#allocation3], 1
    %1327 = vsyncpa %s1326, 1
    %1328 = vsyncpa [#allocation6], 1
    %1329 = vsyncpa [#allocation4], 1
    %s1330 = scalar_lea.sflag [#allocation4], 1
    %1331 = vsyncpa %s1330, 1

</llo_original>
